<compile_context>
chip_gen: v5e
topology: v5e:2x2
jax: 0.10.0
libtpu: 0.0.40
codegen_flags: <defaults>
</compile_context>

<pallas_src>
import functools

import jax
import jax.numpy as jnp
from jax import lax
from jax.experimental import pallas as pl
from jax.experimental.pallas import tpu as pltpu

_EPS = 1e-5


def _pad8(n: int) -> int:
    return ((n + 7) // 8) * 8


# --------------------------------------------------------------------------
# Fused SEM kernel. Single invocation (no grid). Activations are (C_pad, L)
# f32 matrices with L = N*H*W (channel on sublanes, batch*space on lanes).
# --------------------------------------------------------------------------
def _sem_kernel(x_ref, masks_ref, onesb_ref, wxy_ref, wmid_ref, woc_ref,
                o_ref, *, W, K, CPI, CPO):
    L = x_ref.shape[-1]
    r = K // 2
    x = x_ref[...]            # (CPI, L)
    onesb = onesb_ref[...]    # (8, L): row 0 = ones, rows 1..7 = zeros

    def tap(v, dy, dx):
        # Sample v at spatial offset (dy, dx) with "same" zero padding.
        # In the (C, N*H*W) layout a spatial shift is a lane rotation (XLU)
        # plus a precomputed boundary-mask multiply (VPU); the mask zeroes
        # every lane whose source fell in the padding, including lanes that
        # wrapped across row or image boundaries.
        off = dy * W + dx
        vt = v if off == 0 else pltpu.roll(v, (-off) % L, axis=1)
        if dy == 0 and dx == 0:
            return vt
        m = masks_ref[(dy + r) * K + (dx + r)]        # (CB, L) full-tile read
        return vt * m[:v.shape[0]]

    def matmul_relu6(w_ref_, patch):
        # Bias is already folded into the contraction (ones block / bias col).
        y = jnp.dot(w_ref_[...], patch, preferred_element_type=jnp.float32)
        return jnp.clip(y, 0.0, 6.0)                  # ReLU6

    # ---- stage 1: convx & convy (1x1, BN folded) fused into one matmul ----
    p1 = jnp.concatenate([x, onesb], axis=0)          # (CPI + 8, L)
    cxy = matmul_relu6(wxy_ref, p1)                   # (2*CPI, L)
    cx, cy = cxy[:CPI], cxy[CPI:2 * CPI]              # tile-aligned split

    # ---- stage 2: Recx(1xK) | Recy(Kx1) | conv(KxK) block-diagonal --------
    cols = ([tap(cx, 0, dx) for dx in range(-r, r + 1)]
            + [tap(cy, dy, 0) for dy in range(-r, r + 1)]
            + [tap(x, dy, dx) for dy in range(-r, r + 1)
                              for dx in range(-r, r + 1)]
            + [onesb])
    p2 = jnp.concatenate(cols, axis=0)                # ((2K+K*K)*CPI + 8, L)
    mid = matmul_relu6(wmid_ref, p2)                  # (3*CPO, L)
    # per-branch ReLU6 already applied above; now the 3-way branch sum
    s = mid[:CPO] + mid[CPO:2 * CPO] + mid[2 * CPO:3 * CPO]

    # ---- stage 3: outconv (KxK) --------------------------------------------
    cols3 = ([tap(s, dy, dx) for dy in range(-r, r + 1)
                             for dx in range(-r, r + 1)]
             + [onesb])
    p3 = jnp.concatenate(cols3, axis=0)               # (K*K*CPO + 8, L)
    out = matmul_relu6(woc_ref, p3)                   # (CPO, L)
    o_ref[...] = out.astype(o_ref.dtype)


# --------------------------------------------------------------------------
# Host-side helpers: BN folding, padded im2col weight packing, tap masks.
# --------------------------------------------------------------------------
def _fold_bn(blk):
    """Fold inference BN into the conv weight. Returns (OIHW weight, bias)."""
    w, gamma, beta, mean, var = (blk["w"], blk["gamma"], blk["beta"],
                                 blk["mean"], blk["var"])
    scale = gamma / jnp.sqrt(var + _EPS)
    return w * scale[:, None, None, None], beta - mean * scale


def _pack_im2col(blk, cpi, cpo):
    """Pack one folded conv into the kernel's padded im2col layout.
    Returns (w2d (cpo, kh*kw*cpi), bias block (cpo, 8)); column order inside
    w2d is (kh, kw, cin) row-major (matches the kernel tap ordering);
    all padded rows / columns are zero so padding lanes never leak."""
    w_f, b = _fold_bn(blk)
    cout, cin, kh, kw = w_f.shape
    w_t = jnp.transpose(w_f, (0, 2, 3, 1)).reshape(cout, kh * kw, cin)
    w_t = jnp.pad(w_t, ((0, cpo - cout), (0, 0), (0, cpi - cin)))
    w2d = w_t.reshape(cpo, kh * kw * cpi)
    bcol = jnp.zeros((cpo, 8), jnp.float32).at[:cout, 0].set(b)
    return w2d, bcol


def _build_tap_masks(H, W, k, n_batch, rows):
    """(k*k, rows, n_batch*H*W) f32 masks, pre-broadcast over `rows` sublanes
    and tiled per image; mask[t] zeroes positions whose shifted source pixel
    falls in the zero padding, for tap t = (dy+r)*k + (dx+r)."""
    r = k // 2
    ys = jnp.arange(H)[:, None]
    xs = jnp.arange(W)[None, :]
    ms = []
    for dy in range(-r, r + 1):
        for dx in range(-r, r + 1):
            valid = ((ys + dy >= 0) & (ys + dy < H) &
                     (xs + dx >= 0) & (xs + dx < W)).reshape(1, H * W)
            ms.append(valid)
    m = jnp.stack(ms, axis=0).astype(jnp.float32)      # (k*k, 1, H*W)
    return jnp.tile(m, (1, rows, n_batch))             # (k*k, rows, N*H*W)


def _make_block(key, cin, cout, kh, kw):
    """Synthetic Conv2d(no bias) + BatchNorm2d(inference) parameters."""
    kw_, kg, kb, km, kv = jax.random.split(key, 5)
    fan_in = cin * kh * kw
    std = 1.0 / jnp.sqrt(fan_in)                       # kaiming_normal_(a=1)
    w = std * jax.random.normal(kw_, (cout, cin, kh, kw), jnp.float32)  # OIHW
    gamma = 1.0 + 0.2 * jax.random.normal(kg, (cout,), jnp.float32)
    beta = 0.1 * jax.random.normal(kb, (cout,), jnp.float32)
    mean = 0.1 * jax.random.normal(km, (cout,), jnp.float32)
    var = 1.0 + 0.2 * jax.random.uniform(kv, (cout,), jnp.float32)
    return dict(w=w, gamma=gamma, beta=beta, mean=mean, var=var)


def make_sem_params(key, cin, cout, k=3):
    keys = jax.random.split(key, 6)
    return {
        "convx":   _make_block(keys[0], cin, cin, 1, 1),
        "convy":   _make_block(keys[1], cin, cin, 1, 1),
        "Recx":    _make_block(keys[2], cin, cout, 1, k),   # (1, k) conv
        "Recy":    _make_block(keys[3], cin, cout, k, 1),   # (k, 1) conv
        "conv":    _make_block(keys[4], cin, cout, k, k),
        "outconv": _make_block(keys[5], cout, cout, k, k),
    }


# --------------------------------------------------------------------------
# SEM forward:  outconv(Recx(convx(x)) + Recy(convy(x)) + conv(x))
# x is NCHW (PyTorch layout); one fused pallas_call, no grid.
# --------------------------------------------------------------------------
def sem_forward(x_nchw, params, k=3):
    N, CIN, H, W = x_nchw.shape
    COUT = params["outconv"]["w"].shape[0]
    CPI, CPO = _pad8(CIN), _pad8(COUT)
    CB = max(CPI, CPO)
    L = N * H * W                                      # lane dim (512 here)

    # --- activations: (C_pad, N*H*W), channel on sublanes, space on lanes ---
    x_flat = jnp.transpose(x_nchw, (1, 0, 2, 3)).reshape(CIN, L)
    x_pad = jnp.pad(x_flat.astype(jnp.float32), ((0, CPI - CIN), (0, 0)))

    masks = _build_tap_masks(H, W, k, N, CB)           # (k*k, CB, L)
    onesb = jnp.zeros((8, L), jnp.float32).at[0, :].set(1.0)

    # --- weight packing (BN + bias folded, channels padded to 8) -----------
    wcx, bcx = _pack_im2col(params["convx"], CPI, CPI)
    wcy, bcy = _pack_im2col(params["convy"], CPI, CPI)
    wxy = jnp.concatenate(
        [jnp.concatenate([wcx, bcx], axis=1),
         jnp.concatenate([wcy, bcy], axis=1)], axis=0)          # (2*CPI, CPI+8)

    wrx, brx = _pack_im2col(params["Recx"], CPI, CPO)           # (CPO, k*CPI)
    wry, bry = _pack_im2col(params["Recy"], CPI, CPO)
    wc3, bc3 = _pack_im2col(params["conv"], CPI, CPO)           # (CPO, k*k*CPI)
    n_rx, n_ry, n_c3 = wrx.shape[1], wry.shape[1], wc3.shape[1]
    z = lambda c: jnp.zeros((CPO, c), jnp.float32)
    wmid = jnp.concatenate(
        [jnp.concatenate([wrx, z(n_ry + n_c3), brx], axis=1),
         jnp.concatenate([z(n_rx), wry, z(n_c3), bry], axis=1),
         jnp.concatenate([z(n_rx + n_ry), wc3, bc3], axis=1)],
        axis=0)                                        # (3*CPO, n_rx+n_ry+n_c3+8)

    woc_w, woc_b = _pack_im2col(params["outconv"], CPO, CPO)
    woc = jnp.concatenate([woc_w, woc_b], axis=1)      # (CPO, k*k*CPO+8)

    kern = functools.partial(_sem_kernel, W=W, K=k, CPI=CPI, CPO=CPO)
    vspec = lambda: pl.BlockSpec(memory_space=pltpu.MemorySpace.VMEM)

    out_flat = pl.pallas_call(
        kern,
        out_shape=jax.ShapeDtypeStruct((CPO, L), jnp.float32),
        in_specs=[vspec() for _ in range(6)],
        out_specs=vspec(),
    )(x_pad, masks, onesb, wxy, wmid, woc)

    out = jnp.transpose(out_flat.reshape(CPO, N, H, W), (1, 0, 2, 3))
    return out[:, :COUT].astype(x_nchw.dtype)


# --------------------------------------------------------------------------
# Pure-JAX reference (lax.conv, unfolded BN) for a tight sanity check.
# --------------------------------------------------------------------------
def _ref_conv_bn_act(x, blk):
    w, gamma, beta, mean, var = (blk["w"], blk["gamma"], blk["beta"],
                                 blk["mean"], blk["var"])
    kh, kw = w.shape[2], w.shape[3]
    y = lax.conv_general_dilated(
        x, w, window_strides=(1, 1),
        padding=(((kh - 1) // 2,) * 2, ((kw - 1) // 2,) * 2),
        dimension_numbers=("NCHW", "OIHW", "NCHW"))
    inv = 1.0 / jnp.sqrt(var + _EPS)
    y = (y - mean[None, :, None, None]) * inv[None, :, None, None]
    y = y * gamma[None, :, None, None] + beta[None, :, None, None]
    return jnp.clip(y, 0.0, 6.0)


def _ref_sem(x, params, k=3):
    cx = _ref_conv_bn_act(x, params["convx"])
    cy = _ref_conv_bn_act(x, params["convy"])
    rx = _ref_conv_bn_act(cx, params["Recx"])
    ry = _ref_conv_bn_act(cy, params["Recy"])
    c3 = _ref_conv_bn_act(x, params["conv"])
    return _ref_conv_bn_act(rx + ry + c3, params["outconv"])


if __name__ == "__main__":
    N, CIN, H, W = 2, 4, 16, 16      # PyTorch input NCHW (2, 4, 16, 16)
    COUT = 8

    key = jax.random.PRNGKey(0)
    kx, kp = jax.random.split(key)
    x_nchw = jax.random.normal(kx, (N, CIN, H, W), jnp.float32)

    params = make_sem_params(kp, CIN, COUT, k=3)

    out = sem_forward(x_nchw, params, k=3)
    out = jax.block_until_ready(out)
    assert out.shape == (N, COUT, H, W), out.shape

    ref = jax.block_until_ready(_ref_sem(x_nchw, params, k=3))
    err = float(jnp.max(jnp.abs(out - ref)))
    assert err < 1e-3, err

    print("KERNEL_OK")
</pallas_src>

<mosaic_0001>
module attributes {stable_mosaic.version = 11 : i64} {
  func.func @_sem_kernel(%arg0: memref<8x512xf32, #tpu.memory_space<vmem>>, %arg1: memref<9x8x512xf32, #tpu.memory_space<vmem>>, %arg2: memref<8x512xf32, #tpu.memory_space<vmem>>, %arg3: memref<16x16xf32, #tpu.memory_space<vmem>>, %arg4: memref<24x128xf32, #tpu.memory_space<vmem>>, %arg5: memref<8x80xf32, #tpu.memory_space<vmem>>, %arg6: memref<8x512xf32, #tpu.memory_space<vmem>>) attributes {dimension_semantics = [], scalar_prefetch = 0 : i64, scratch_operands = 0 : i64, tpu.core_type = #tpu.core_type<tc>} {
    %c0 = arith.constant 0 : index
    %c0_0 = arith.constant 0 : index
    %0 = vector.load %arg0[%c0, %c0_0] : memref<8x512xf32, #tpu.memory_space<vmem>>, vector<8x512xf32>
    %c0_1 = arith.constant 0 : index
    %c0_2 = arith.constant 0 : index
    %1 = vector.load %arg2[%c0_1, %c0_2] : memref<8x512xf32, #tpu.memory_space<vmem>>, vector<8x512xf32>
    %2 = tpu.concatenate %0, %1 in 0 : vector<8x512xf32>, vector<8x512xf32> -> vector<16x512xf32>
    %c0_3 = arith.constant 0 : index
    %c0_4 = arith.constant 0 : index
    %3 = vector.load %arg3[%c0_3, %c0_4] : memref<16x16xf32, #tpu.memory_space<vmem>>, vector<16x16xf32>
    %cst = arith.constant dense<0.000000e+00> : vector<16x512xf32>
    %4 = tpu.matmul %3, %2, %cst {dimension_numbers = #tpu.dot_dimension_numbers<[1], [0], [0], [1], [0, 0, 1, 1], [], []>} : vector<16x16xf32>, vector<16x512xf32>, vector<16x512xf32> -> vector<16x512xf32>
    %cst_5 = arith.constant 0.000000e+00 : f32
    %cst_6 = arith.constant 6.000000e+00 : f32
    %5 = vector.broadcast %cst_5 : f32 to vector<16x512xf32>
    %6 = arith.maximumf %5, %4 : vector<16x512xf32>
    %7 = vector.broadcast %cst_6 : f32 to vector<16x512xf32>
    %8 = arith.minimumf %7, %6 : vector<16x512xf32>
    %9 = vector.extract_strided_slice %8 {offsets = [0, 0], sizes = [8, 512], strides = [1, 1]} : vector<16x512xf32> to vector<8x512xf32>
    %10 = vector.extract_strided_slice %8 {offsets = [8, 0], sizes = [8, 512], strides = [1, 1]} : vector<16x512xf32> to vector<8x512xf32>
    %c1_i32 = arith.constant 1 : i32
    %11 = tpu.dynamic_rotate %9 by %c1_i32 dim 1 : vector<8x512xf32>, i32 -> vector<8x512xf32>
    %c3 = arith.constant 3 : index
    %c0_7 = arith.constant 0 : index
    %c0_8 = arith.constant 0 : index
    %12 = vector.load %arg1[%c3, %c0_7, %c0_8] : memref<9x8x512xf32, #tpu.memory_space<vmem>>, vector<1x8x512xf32>
    %13 = vector.shape_cast %12 : vector<1x8x512xf32> to vector<8x512xf32>
    %14 = arith.mulf %11, %13 : vector<8x512xf32>
    %c511_i32 = arith.constant 511 : i32
    %15 = tpu.dynamic_rotate %9 by %c511_i32 dim 1 : vector<8x512xf32>, i32 -> vector<8x512xf32>
    %c5 = arith.constant 5 : index
    %c0_9 = arith.constant 0 : index
    %c0_10 = arith.constant 0 : index
    %16 = vector.load %arg1[%c5, %c0_9, %c0_10] : memref<9x8x512xf32, #tpu.memory_space<vmem>>, vector<1x8x512xf32>
    %17 = vector.shape_cast %16 : vector<1x8x512xf32> to vector<8x512xf32>
    %18 = arith.mulf %15, %17 : vector<8x512xf32>
    %c16_i32 = arith.constant 16 : i32
    %19 = tpu.dynamic_rotate %10 by %c16_i32 dim 1 : vector<8x512xf32>, i32 -> vector<8x512xf32>
    %c1 = arith.constant 1 : index
    %c0_11 = arith.constant 0 : index
    %c0_12 = arith.constant 0 : index
    %20 = vector.load %arg1[%c1, %c0_11, %c0_12] : memref<9x8x512xf32, #tpu.memory_space<vmem>>, vector<1x8x512xf32>
    %21 = vector.shape_cast %20 : vector<1x8x512xf32> to vector<8x512xf32>
    %22 = arith.mulf %19, %21 : vector<8x512xf32>
    %c496_i32 = arith.constant 496 : i32
    %23 = tpu.dynamic_rotate %10 by %c496_i32 dim 1 : vector<8x512xf32>, i32 -> vector<8x512xf32>
    %c7 = arith.constant 7 : index
    %c0_13 = arith.constant 0 : index
    %c0_14 = arith.constant 0 : index
    %24 = vector.load %arg1[%c7, %c0_13, %c0_14] : memref<9x8x512xf32, #tpu.memory_space<vmem>>, vector<1x8x512xf32>
    %25 = vector.shape_cast %24 : vector<1x8x512xf32> to vector<8x512xf32>
    %26 = arith.mulf %23, %25 : vector<8x512xf32>
    %c17_i32 = arith.constant 17 : i32
    %27 = tpu.dynamic_rotate %0 by %c17_i32 dim 1 : vector<8x512xf32>, i32 -> vector<8x512xf32>
    %c0_15 = arith.constant 0 : index
    %c0_16 = arith.constant 0 : index
    %c0_17 = arith.constant 0 : index
    %28 = vector.load %arg1[%c0_15, %c0_16, %c0_17] : memref<9x8x512xf32, #tpu.memory_space<vmem>>, vector<1x8x512xf32>
    %29 = vector.shape_cast %28 : vector<1x8x512xf32> to vector<8x512xf32>
    %30 = arith.mulf %27, %29 : vector<8x512xf32>
    %c16_i32_18 = arith.constant 16 : i32
    %31 = tpu.dynamic_rotate %0 by %c16_i32_18 dim 1 : vector<8x512xf32>, i32 -> vector<8x512xf32>
    %c1_19 = arith.constant 1 : index
    %c0_20 = arith.constant 0 : index
    %c0_21 = arith.constant 0 : index
    %32 = vector.load %arg1[%c1_19, %c0_20, %c0_21] : memref<9x8x512xf32, #tpu.memory_space<vmem>>, vector<1x8x512xf32>
    %33 = vector.shape_cast %32 : vector<1x8x512xf32> to vector<8x512xf32>
    %34 = arith.mulf %31, %33 : vector<8x512xf32>
    %c15_i32 = arith.constant 15 : i32
    %35 = tpu.dynamic_rotate %0 by %c15_i32 dim 1 : vector<8x512xf32>, i32 -> vector<8x512xf32>
    %c2 = arith.constant 2 : index
    %c0_22 = arith.constant 0 : index
    %c0_23 = arith.constant 0 : index
    %36 = vector.load %arg1[%c2, %c0_22, %c0_23] : memref<9x8x512xf32, #tpu.memory_space<vmem>>, vector<1x8x512xf32>
    %37 = vector.shape_cast %36 : vector<1x8x512xf32> to vector<8x512xf32>
    %38 = arith.mulf %35, %37 : vector<8x512xf32>
    %c1_i32_24 = arith.constant 1 : i32
    %39 = tpu.dynamic_rotate %0 by %c1_i32_24 dim 1 : vector<8x512xf32>, i32 -> vector<8x512xf32>
    %c3_25 = arith.constant 3 : index
    %c0_26 = arith.constant 0 : index
    %c0_27 = arith.constant 0 : index
    %40 = vector.load %arg1[%c3_25, %c0_26, %c0_27] : memref<9x8x512xf32, #tpu.memory_space<vmem>>, vector<1x8x512xf32>
    %41 = vector.shape_cast %40 : vector<1x8x512xf32> to vector<8x512xf32>
    %42 = arith.mulf %39, %41 : vector<8x512xf32>
    %c511_i32_28 = arith.constant 511 : i32
    %43 = tpu.dynamic_rotate %0 by %c511_i32_28 dim 1 : vector<8x512xf32>, i32 -> vector<8x512xf32>
    %c5_29 = arith.constant 5 : index
    %c0_30 = arith.constant 0 : index
    %c0_31 = arith.constant 0 : index
    %44 = vector.load %arg1[%c5_29, %c0_30, %c0_31] : memref<9x8x512xf32, #tpu.memory_space<vmem>>, vector<1x8x512xf32>
    %45 = vector.shape_cast %44 : vector<1x8x512xf32> to vector<8x512xf32>
    %46 = arith.mulf %43, %45 : vector<8x512xf32>
    %c497_i32 = arith.constant 497 : i32
    %47 = tpu.dynamic_rotate %0 by %c497_i32 dim 1 : vector<8x512xf32>, i32 -> vector<8x512xf32>
    %c6 = arith.constant 6 : index
    %c0_32 = arith.constant 0 : index
    %c0_33 = arith.constant 0 : index
    %48 = vector.load %arg1[%c6, %c0_32, %c0_33] : memref<9x8x512xf32, #tpu.memory_space<vmem>>, vector<1x8x512xf32>
    %49 = vector.shape_cast %48 : vector<1x8x512xf32> to vector<8x512xf32>
    %50 = arith.mulf %47, %49 : vector<8x512xf32>
    %c496_i32_34 = arith.constant 496 : i32
    %51 = tpu.dynamic_rotate %0 by %c496_i32_34 dim 1 : vector<8x512xf32>, i32 -> vector<8x512xf32>
    %c7_35 = arith.constant 7 : index
    %c0_36 = arith.constant 0 : index
    %c0_37 = arith.constant 0 : index
    %52 = vector.load %arg1[%c7_35, %c0_36, %c0_37] : memref<9x8x512xf32, #tpu.memory_space<vmem>>, vector<1x8x512xf32>
    %53 = vector.shape_cast %52 : vector<1x8x512xf32> to vector<8x512xf32>
    %54 = arith.mulf %51, %53 : vector<8x512xf32>
    %c495_i32 = arith.constant 495 : i32
    %55 = tpu.dynamic_rotate %0 by %c495_i32 dim 1 : vector<8x512xf32>, i32 -> vector<8x512xf32>
    %c8 = arith.constant 8 : index
    %c0_38 = arith.constant 0 : index
    %c0_39 = arith.constant 0 : index
    %56 = vector.load %arg1[%c8, %c0_38, %c0_39] : memref<9x8x512xf32, #tpu.memory_space<vmem>>, vector<1x8x512xf32>
    %57 = vector.shape_cast %56 : vector<1x8x512xf32> to vector<8x512xf32>
    %58 = arith.mulf %55, %57 : vector<8x512xf32>
    %59 = tpu.concatenate %14, %9, %18, %22, %10, %26, %30, %34, %38, %42, %0, %46, %50, %54, %58, %1 in 0 : vector<8x512xf32>, vector<8x512xf32>, vector<8x512xf32>, vector<8x512xf32>, vector<8x512xf32>, vector<8x512xf32>, vector<8x512xf32>, vector<8x512xf32>, vector<8x512xf32>, vector<8x512xf32>, vector<8x512xf32>, vector<8x512xf32>, vector<8x512xf32>, vector<8x512xf32>, vector<8x512xf32>, vector<8x512xf32> -> vector<128x512xf32>
    %c0_40 = arith.constant 0 : index
    %c0_41 = arith.constant 0 : index
    %60 = vector.load %arg4[%c0_40, %c0_41] : memref<24x128xf32, #tpu.memory_space<vmem>>, vector<24x128xf32>
    %cst_42 = arith.constant dense<0.000000e+00> : vector<24x512xf32>
    %61 = tpu.matmul %60, %59, %cst_42 {dimension_numbers = #tpu.dot_dimension_numbers<[1], [0], [0], [1], [0, 0, 1, 1], [], []>} : vector<24x128xf32>, vector<128x512xf32>, vector<24x512xf32> -> vector<24x512xf32>
    %cst_43 = arith.constant 0.000000e+00 : f32
    %cst_44 = arith.constant 6.000000e+00 : f32
    %62 = vector.broadcast %cst_43 : f32 to vector<24x512xf32>
    %63 = arith.maximumf %62, %61 : vector<24x512xf32>
    %64 = vector.broadcast %cst_44 : f32 to vector<24x512xf32>
    %65 = arith.minimumf %64, %63 : vector<24x512xf32>
    %66 = vector.extract_strided_slice %65 {offsets = [0, 0], sizes = [8, 512], strides = [1, 1]} : vector<24x512xf32> to vector<8x512xf32>
    %67 = vector.extract_strided_slice %65 {offsets = [8, 0], sizes = [8, 512], strides = [1, 1]} : vector<24x512xf32> to vector<8x512xf32>
    %68 = arith.addf %66, %67 : vector<8x512xf32>
    %69 = vector.extract_strided_slice %65 {offsets = [16, 0], sizes = [8, 512], strides = [1, 1]} : vector<24x512xf32> to vector<8x512xf32>
    %70 = arith.addf %68, %69 : vector<8x512xf32>
    %c17_i32_45 = arith.constant 17 : i32
    %71 = tpu.dynamic_rotate %70 by %c17_i32_45 dim 1 : vector<8x512xf32>, i32 -> vector<8x512xf32>
    %c0_46 = arith.constant 0 : index
    %c0_47 = arith.constant 0 : index
    %c0_48 = arith.constant 0 : index
    %72 = vector.load %arg1[%c0_46, %c0_47, %c0_48] : memref<9x8x512xf32, #tpu.memory_space<vmem>>, vector<1x8x512xf32>
    %73 = vector.shape_cast %72 : vector<1x8x512xf32> to vector<8x512xf32>
    %74 = arith.mulf %71, %73 : vector<8x512xf32>
    %c16_i32_49 = arith.constant 16 : i32
    %75 = tpu.dynamic_rotate %70 by %c16_i32_49 dim 1 : vector<8x512xf32>, i32 -> vector<8x512xf32>
    %c1_50 = arith.constant 1 : index
    %c0_51 = arith.constant 0 : index
    %c0_52 = arith.constant 0 : index
    %76 = vector.load %arg1[%c1_50, %c0_51, %c0_52] : memref<9x8x512xf32, #tpu.memory_space<vmem>>, vector<1x8x512xf32>
    %77 = vector.shape_cast %76 : vector<1x8x512xf32> to vector<8x512xf32>
    %78 = arith.mulf %75, %77 : vector<8x512xf32>
    %c15_i32_53 = arith.constant 15 : i32
    %79 = tpu.dynamic_rotate %70 by %c15_i32_53 dim 1 : vector<8x512xf32>, i32 -> vector<8x512xf32>
    %c2_54 = arith.constant 2 : index
    %c0_55 = arith.constant 0 : index
    %c0_56 = arith.constant 0 : index
    %80 = vector.load %arg1[%c2_54, %c0_55, %c0_56] : memref<9x8x512xf32, #tpu.memory_space<vmem>>, vector<1x8x512xf32>
    %81 = vector.shape_cast %80 : vector<1x8x512xf32> to vector<8x512xf32>
    %82 = arith.mulf %79, %81 : vector<8x512xf32>
    %c1_i32_57 = arith.constant 1 : i32
    %83 = tpu.dynamic_rotate %70 by %c1_i32_57 dim 1 : vector<8x512xf32>, i32 -> vector<8x512xf32>
    %c3_58 = arith.constant 3 : index
    %c0_59 = arith.constant 0 : index
    %c0_60 = arith.constant 0 : index
    %84 = vector.load %arg1[%c3_58, %c0_59, %c0_60] : memref<9x8x512xf32, #tpu.memory_space<vmem>>, vector<1x8x512xf32>
    %85 = vector.shape_cast %84 : vector<1x8x512xf32> to vector<8x512xf32>
    %86 = arith.mulf %83, %85 : vector<8x512xf32>
    %c511_i32_61 = arith.constant 511 : i32
    %87 = tpu.dynamic_rotate %70 by %c511_i32_61 dim 1 : vector<8x512xf32>, i32 -> vector<8x512xf32>
    %c5_62 = arith.constant 5 : index
    %c0_63 = arith.constant 0 : index
    %c0_64 = arith.constant 0 : index
    %88 = vector.load %arg1[%c5_62, %c0_63, %c0_64] : memref<9x8x512xf32, #tpu.memory_space<vmem>>, vector<1x8x512xf32>
    %89 = vector.shape_cast %88 : vector<1x8x512xf32> to vector<8x512xf32>
    %90 = arith.mulf %87, %89 : vector<8x512xf32>
    %c497_i32_65 = arith.constant 497 : i32
    %91 = tpu.dynamic_rotate %70 by %c497_i32_65 dim 1 : vector<8x512xf32>, i32 -> vector<8x512xf32>
    %c6_66 = arith.constant 6 : index
    %c0_67 = arith.constant 0 : index
    %c0_68 = arith.constant 0 : index
    %92 = vector.load %arg1[%c6_66, %c0_67, %c0_68] : memref<9x8x512xf32, #tpu.memory_space<vmem>>, vector<1x8x512xf32>
    %93 = vector.shape_cast %92 : vector<1x8x512xf32> to vector<8x512xf32>
    %94 = arith.mulf %91, %93 : vector<8x512xf32>
    %c496_i32_69 = arith.constant 496 : i32
    %95 = tpu.dynamic_rotate %70 by %c496_i32_69 dim 1 : vector<8x512xf32>, i32 -> vector<8x512xf32>
    %c7_70 = arith.constant 7 : index
    %c0_71 = arith.constant 0 : index
    %c0_72 = arith.constant 0 : index
    %96 = vector.load %arg1[%c7_70, %c0_71, %c0_72] : memref<9x8x512xf32, #tpu.memory_space<vmem>>, vector<1x8x512xf32>
    %97 = vector.shape_cast %96 : vector<1x8x512xf32> to vector<8x512xf32>
    %98 = arith.mulf %95, %97 : vector<8x512xf32>
    %c495_i32_73 = arith.constant 495 : i32
    %99 = tpu.dynamic_rotate %70 by %c495_i32_73 dim 1 : vector<8x512xf32>, i32 -> vector<8x512xf32>
    %c8_74 = arith.constant 8 : index
    %c0_75 = arith.constant 0 : index
    %c0_76 = arith.constant 0 : index
    %100 = vector.load %arg1[%c8_74, %c0_75, %c0_76] : memref<9x8x512xf32, #tpu.memory_space<vmem>>, vector<1x8x512xf32>
    %101 = vector.shape_cast %100 : vector<1x8x512xf32> to vector<8x512xf32>
    %102 = arith.mulf %99, %101 : vector<8x512xf32>
    %103 = tpu.concatenate %74, %78, %82, %86, %70, %90, %94, %98, %102, %1 in 0 : vector<8x512xf32>, vector<8x512xf32>, vector<8x512xf32>, vector<8x512xf32>, vector<8x512xf32>, vector<8x512xf32>, vector<8x512xf32>, vector<8x512xf32>, vector<8x512xf32>, vector<8x512xf32> -> vector<80x512xf32>
    %c0_77 = arith.constant 0 : index
    %c0_78 = arith.constant 0 : index
    %104 = vector.load %arg5[%c0_77, %c0_78] : memref<8x80xf32, #tpu.memory_space<vmem>>, vector<8x80xf32>
    %cst_79 = arith.constant dense<0.000000e+00> : vector<8x512xf32>
    %105 = tpu.matmul %104, %103, %cst_79 {dimension_numbers = #tpu.dot_dimension_numbers<[1], [0], [0], [1], [0, 0, 1, 1], [], []>} : vector<8x80xf32>, vector<80x512xf32>, vector<8x512xf32> -> vector<8x512xf32>
    %cst_80 = arith.constant 0.000000e+00 : f32
    %cst_81 = arith.constant 6.000000e+00 : f32
    %106 = vector.broadcast %cst_80 : f32 to vector<8x512xf32>
    %107 = arith.maximumf %106, %105 : vector<8x512xf32>
    %108 = vector.broadcast %cst_81 : f32 to vector<8x512xf32>
    %109 = arith.minimumf %108, %107 : vector<8x512xf32>
    %c0_82 = arith.constant 0 : index
    %c0_83 = arith.constant 0 : index
    %110 = vector.load %arg6[%c0_82, %c0_83] : memref<8x512xf32, #tpu.memory_space<vmem>>, vector<8x512xf32>
    tpu.vector_store %arg6[%c0_82, %c0_83], %109 {strides = array<i32>} : memref<8x512xf32, #tpu.memory_space<vmem>>, vector<8x512xf32>,
    return
  }
}

</mosaic_0001>

<llo_original>
// kernel: tpu_custom_call.1
$region0: #{tpu_custom_call.1}
  #allocation0 [shape = 'u32[]', space=smem, size = 0x4, offset = 0x4, fixed_abs, tag = 'smem constant byte address 0x4 - core index']
  #allocation1 [shape = 'u32[72,128]{1,0:T(1,128)}', space=vmem, size = 0x9000, scoped, tag = 'internal scratch']
  %s0 = inlined_call_operand.hbm [shape: f32[8,512], index: 0, kind: input, shape index: {}]
  %s1 = inlined_call_operand.hbm [shape: f32[9,8,512], index: 1, kind: input, shape index: {}]
  %s2 = inlined_call_operand.hbm [shape: f32[8,512], index: 2, kind: input, shape index: {}]
  %s3 = inlined_call_operand.hbm [shape: f32[16,16], index: 3, kind: input, shape index: {}]
  %s4 = inlined_call_operand.hbm [shape: f32[24,128], index: 4, kind: input, shape index: {}]
  %s5 = inlined_call_operand.hbm [shape: f32[8,80], index: 5, kind: input, shape index: {}]
  %s6 = inlined_call_operand.hbm [shape: f32[8,512], index: 6, kind: output, shape index: {}]
  %s7 = sld [smem:[#allocation0]]
  $region58: #{tpu_custom_call.1} parent=0
    _
  %s9 = ssub.s32 1, %s7
  %s10 = scalar_select 0, %s9, %s7
  $region1: #{tpu_custom_call.1} parent=0
    #allocation2 [shape = 'u8[16384]{0}', space=vmem, size = 0x4000, scoped, tag = 'input window, operand 0, single buffered']
    #allocation3 [shape = 's32[1]{0}', space=sflag, size = 0x4, scoped, tag = 'scoped memory for tpu_custom_call.1']
    #allocation4 [shape = 's32[1]{0}', space=sflag, size = 0x4, scoped, tag = 'scoped memory for tpu_custom_call.1']
    #allocation5 [shape = 'u8[147456]{0}', space=vmem, size = 0x24000, scoped, tag = 'input window, operand 1, single buffered']
    #allocation6 [shape = 's32[1]{0}', space=sflag, size = 0x4, scoped, tag = 'scoped memory for tpu_custom_call.1']
    #allocation7 [shape = 'u8[16384]{0}', space=vmem, size = 0x4000, scoped, tag = 'input window, operand 2, single buffered']
    #allocation8 [shape = 'u8[8192]{0}', space=vmem, size = 0x2000, scoped, tag = 'input window, operand 3, single buffered']
    #allocation9 [shape = 's32[1]{0}', space=sflag, size = 0x4, scoped, tag = 'scoped memory for tpu_custom_call.1']
    #allocation10 [shape = 'u8[12288]{0}', space=vmem, size = 0x3000, scoped, tag = 'input window, operand 4, single buffered']
    #allocation11 [shape = 'u8[4096]{0}', space=vmem, size = 0x1000, scoped, tag = 'input window, operand 5, single buffered']
    #allocation12 [shape = 's32[1]{0}', space=sflag, size = 0x4, scoped, tag = 'scoped memory for tpu_custom_call.1']
    #allocation13 [shape = 'u8[16384]{0}', space=vmem, size = 0x4000, scoped, tag = 'output window, operand 0, single buffered']
    %11 = vsyncpa [#allocation3], 0
    %12 = vsyncpa [#allocation6], 0
    %13 = vsyncpa [#allocation9], 0
    %14 = vsyncpa [#allocation12], 0
    %15 = vsyncpa [#allocation4], 0
    // Predicated region
    $region2: #{tpu_custom_call.1} parent=1 // pred_check
      _
    $region3: #{tpu_custom_call.1} parent=1 // pred_check_branch
      %17 = sbr.rel (0) target = $region5
    $region4: #{tpu_custom_call.1} parent=1 // pred_region
      %19 = vsyncadd [#allocation3], 0
      %s21 = sshll.u32 %s0, 4
      %s22 = int_to_ptr.hbm [resolvable:$true] %s21
      %s23 = sshll.u32 [#allocation2], 4
      %s24 = int_to_ptr.vmem [resolvable:$true] %s23
      %26 = dma.hbm_to_vmem [thread:$0]  %s22, 512, %s24, [#allocation3]
    $region5: #{tpu_custom_call.1} parent=1 // pred_fallthru
      _
    // Predicated region
    $region6: #{tpu_custom_call.1} parent=1 // pred_check
      _
    $region7: #{tpu_custom_call.1} parent=1 // pred_check_branch
      %28 = sbr.rel (0) target = $region9
    $region8: #{tpu_custom_call.1} parent=1 // pred_region
      %30 = vsyncadd [#allocation6], 0
      %s31 = sshll.u32 %s1, 4
      %s32 = int_to_ptr.hbm [resolvable:$true] %s31
      %s33 = sshll.u32 [#allocation5], 4
      %s34 = int_to_ptr.vmem [resolvable:$true] %s33
      %39 = dma.hbm_to_vmem [thread:$0]  %s32, 4608, %s34, [#allocation6], 512, 512, 32
    $region9: #{tpu_custom_call.1} parent=1 // pred_fallthru
      _
    // Predicated region
    $region10: #{tpu_custom_call.1} parent=1 // pred_check
      _
    $region11: #{tpu_custom_call.1} parent=1 // pred_check_branch
      %41 = sbr.rel (0) target = $region13
    $region12: #{tpu_custom_call.1} parent=1 // pred_region
      %43 = vsyncadd [#allocation6], 0
      %s45 = sshll.u32 %s2, 4
      %s46 = int_to_ptr.hbm [resolvable:$true] %s45
      %s47 = sshll.u32 [#allocation7], 4
      %s48 = int_to_ptr.vmem [resolvable:$true] %s47
      %50 = dma.hbm_to_vmem [thread:$0]  %s46, 512, %s48, [#allocation6]
    $region13: #{tpu_custom_call.1} parent=1 // pred_fallthru
      _
    // Predicated region
    $region14: #{tpu_custom_call.1} parent=1 // pred_check
      _
    $region15: #{tpu_custom_call.1} parent=1 // pred_check_branch
      %52 = sbr.rel (0) target = $region17
    $region16: #{tpu_custom_call.1} parent=1 // pred_region
      %54 = vsyncadd [#allocation9], 0
      %s55 = sshll.u32 %s3, 4
      %s56 = int_to_ptr.hbm [resolvable:$true] %s55
      %s57 = sshll.u32 [#allocation8], 4
      %s58 = int_to_ptr.vmem [resolvable:$true] %s57
      %63 = dma.hbm_to_vmem [thread:$0]  %s56, 256, %s58, [#allocation9], 128, 128, 8
    $region17: #{tpu_custom_call.1} parent=1 // pred_fallthru
      _
    // Predicated region
    $region18: #{tpu_custom_call.1} parent=1 // pred_check
      _
    $region19: #{tpu_custom_call.1} parent=1 // pred_check_branch
      %65 = sbr.rel (0) target = $region21
    $region20: #{tpu_custom_call.1} parent=1 // pred_region
      %67 = vsyncadd [#allocation9], 0
      %s68 = sshll.u32 %s4, 4
      %s69 = int_to_ptr.hbm [resolvable:$true] %s68
      %s70 = sshll.u32 [#allocation10], 4
      %s71 = int_to_ptr.vmem [resolvable:$true] %s70
      %76 = dma.hbm_to_vmem [thread:$0]  %s69, 384, %s71, [#allocation9], 128, 128, 8
    $region21: #{tpu_custom_call.1} parent=1 // pred_fallthru
      _
    // Predicated region
    $region22: #{tpu_custom_call.1} parent=1 // pred_check
      _
    $region23: #{tpu_custom_call.1} parent=1 // pred_check_branch
      %78 = sbr.rel (0) target = $region25
    $region24: #{tpu_custom_call.1} parent=1 // pred_region
      %80 = vsyncadd [#allocation12], 0
      %s82 = sshll.u32 %s5, 4
      %s83 = int_to_ptr.hbm [resolvable:$true] %s82
      %s84 = sshll.u32 [#allocation11], 4
      %s85 = int_to_ptr.vmem [resolvable:$true] %s84
      %87 = dma.hbm_to_vmem [thread:$0]  %s83, 128, %s85, [#allocation12]
    $region25: #{tpu_custom_call.1} parent=1 // pred_fallthru
      _
    // Predicated region
    $region26: #{tpu_custom_call.1} parent=1 // pred_check
      _
    $region27: #{tpu_custom_call.1} parent=1 // pred_check_branch
      %89 = sbr.rel (0) target = $region29
    $region28: #{tpu_custom_call.1} parent=1 // pred_region
      %91 = dma.done [#allocation3], 512
    $region29: #{tpu_custom_call.1} parent=1 // pred_fallthru
      _
    // Predicated region
    $region30: #{tpu_custom_call.1} parent=1 // pred_check
      _
    $region31: #{tpu_custom_call.1} parent=1 // pred_check_branch
      %93 = sbr.rel (0) target = $region33
    $region32: #{tpu_custom_call.1} parent=1 // pred_region
      %95 = dma.done [#allocation6], 4608
    $region33: #{tpu_custom_call.1} parent=1 // pred_fallthru
      _
    // Predicated region
    $region34: #{tpu_custom_call.1} parent=1 // pred_check
      _
    $region35: #{tpu_custom_call.1} parent=1 // pred_check_branch
      %97 = sbr.rel (0) target = $region37
    $region36: #{tpu_custom_call.1} parent=1 // pred_region
      %99 = dma.done [#allocation6], 512
    $region37: #{tpu_custom_call.1} parent=1 // pred_fallthru
      _
    // Predicated region
    $region38: #{tpu_custom_call.1} parent=1 // pred_check
      _
    $region39: #{tpu_custom_call.1} parent=1 // pred_check_branch
      %101 = sbr.rel (0) target = $region41
    $region40: #{tpu_custom_call.1} parent=1 // pred_region
      %103 = dma.done [#allocation9], 256
    $region41: #{tpu_custom_call.1} parent=1 // pred_fallthru
      _
    // Predicated region
    $region42: #{tpu_custom_call.1} parent=1 // pred_check
      _
    $region43: #{tpu_custom_call.1} parent=1 // pred_check_branch
      %105 = sbr.rel (0) target = $region45
    $region44: #{tpu_custom_call.1} parent=1 // pred_region
      %107 = dma.done [#allocation9], 384
    $region45: #{tpu_custom_call.1} parent=1 // pred_fallthru
      _
    // Predicated region
    $region46: #{tpu_custom_call.1} parent=1 // pred_check
      _
    $region47: #{tpu_custom_call.1} parent=1 // pred_check_branch
      %109 = sbr.rel (0) target = $region49
    $region48: #{tpu_custom_call.1} parent=1 // pred_region
      %111 = dma.done [#allocation12], 128
    $region49: #{tpu_custom_call.1} parent=1 // pred_fallthru
      _
    %v112 = vld [vmem:[#allocation2] sm:$0xff]
    %v113 = vld [vmem:[#allocation2 + $0x8] sm:$0xff]
    %v114 = vld [vmem:[#allocation2 + $0x10] sm:$0xff]
    %v115 = vld [vmem:[#allocation2 + $0x18] sm:$0xff]
    %v116 = vld [vmem:[#allocation7] sm:$0xff]
    %v117 = vld [vmem:[#allocation7 + $0x8] sm:$0xff]
    %v118 = vld [vmem:[#allocation7 + $0x10] sm:$0xff]
    %v119 = vld [vmem:[#allocation7 + $0x18] sm:$0xff]
    %v120 = vld [vmem:[#allocation8] sm:$0xff]
    %v121 = vld [vmem:[#allocation8 + $0x8] sm:$0xff]
    %vm122 = vcmask 130048
    %v124 = vsel %vm122, %v120, 0
    %v127 = vsel %vm122, %v121, 0
    %129 = vmatpush.msra.mxu0 0.0
    %130 = vmatpush.msra.mxu0 0.0
    %131 = vmatpush.msra.mxu0 0.0
    %132 = vmatpush.msra.mxu0 0.0
    %133 = vmatpush.msra.mxu0 0.0
    %134 = vmatpush.msra.mxu0 0.0
    %135 = vmatpush.msra.mxu0 0.0
    %136 = vmatpush.msra.mxu0 0.0
    %137 = vmatpush.msra.mxu0 0.0
    %138 = vmatpush.msra.mxu0 0.0
    %139 = vmatpush.msra.mxu0 0.0
    %140 = vmatpush.msra.mxu0 0.0
    %141 = vmatpush.msra.mxu0 0.0
    %142 = vmatpush.msra.mxu0 0.0
    %143 = vmatpush.msra.mxu0 %v116
    %144 = vmatpush.msra.mxu0 %v112
    %145 = vmatmul.f32.gmra.mxu0 %v124
    %v146 = vpop.f32.mrf.mxu0
    %v147 = vadd.f32 0.0, %v146
    %148 = vmatmul.f32.gmra.mxu0 %v127
    %v149 = vpop.f32.mrf.mxu0
    %v150 = vadd.f32 0.0, %v149
    %151 = vdwg.mxu0
    %152 = vmatpush.msra.mxu0 0.0
    %153 = vmatpush.msra.mxu0 0.0
    %154 = vmatpush.msra.mxu0 0.0
    %155 = vmatpush.msra.mxu0 0.0
    %156 = vmatpush.msra.mxu0 0.0
    %157 = vmatpush.msra.mxu0 0.0
    %158 = vmatpush.msra.mxu0 0.0
    %159 = vmatpush.msra.mxu0 0.0
    %160 = vmatpush.msra.mxu0 0.0
    %161 = vmatpush.msra.mxu0 0.0
    %162 = vmatpush.msra.mxu0 0.0
    %163 = vmatpush.msra.mxu0 0.0
    %164 = vmatpush.msra.mxu0 0.0
    %165 = vmatpush.msra.mxu0 0.0
    %166 = vmatpush.msra.mxu0 %v117
    %167 = vmatpush.msra.mxu0 %v113
    %168 = vmatmul.f32.gmra.mxu0 %v124
    %v169 = vpop.f32.mrf.mxu0
    %v170 = vadd.f32 0.0, %v169
    %171 = vmatmul.f32.gmra.mxu0 %v127
    %v172 = vpop.f32.mrf.mxu0
    %v173 = vadd.f32 0.0, %v172
    %174 = vdwg.mxu0
    %175 = vmatpush.msra.mxu0 0.0
    %176 = vmatpush.msra.mxu0 0.0
    %177 = vmatpush.msra.mxu0 0.0
    %178 = vmatpush.msra.mxu0 0.0
    %179 = vmatpush.msra.mxu0 0.0
    %180 = vmatpush.msra.mxu0 0.0
    %181 = vmatpush.msra.mxu0 0.0
    %182 = vmatpush.msra.mxu0 0.0
    %183 = vmatpush.msra.mxu0 0.0
    %184 = vmatpush.msra.mxu0 0.0
    %185 = vmatpush.msra.mxu0 0.0
    %186 = vmatpush.msra.mxu0 0.0
    %187 = vmatpush.msra.mxu0 0.0
    %188 = vmatpush.msra.mxu0 0.0
    %189 = vmatpush.msra.mxu0 %v118
    %190 = vmatpush.msra.mxu0 %v114
    %191 = vmatmul.f32.gmra.mxu0 %v124
    %v192 = vpop.f32.mrf.mxu0
    %v193 = vadd.f32 0.0, %v192
    %194 = vmatmul.f32.gmra.mxu0 %v127
    %v195 = vpop.f32.mrf.mxu0
    %v196 = vadd.f32 0.0, %v195
    %197 = vdwg.mxu0
    %198 = vmatpush.msra.mxu0 0.0
    %199 = vmatpush.msra.mxu0 0.0
    %200 = vmatpush.msra.mxu0 0.0
    %201 = vmatpush.msra.mxu0 0.0
    %202 = vmatpush.msra.mxu0 0.0
    %203 = vmatpush.msra.mxu0 0.0
    %204 = vmatpush.msra.mxu0 0.0
    %205 = vmatpush.msra.mxu0 0.0
    %206 = vmatpush.msra.mxu0 0.0
    %207 = vmatpush.msra.mxu0 0.0
    %208 = vmatpush.msra.mxu0 0.0
    %209 = vmatpush.msra.mxu0 0.0
    %210 = vmatpush.msra.mxu0 0.0
    %211 = vmatpush.msra.mxu0 0.0
    %212 = vmatpush.msra.mxu0 %v119
    %213 = vmatpush.msra.mxu0 %v115
    %214 = vmatmul.f32.gmra.mxu0 %v124
    %v215 = vpop.f32.mrf.mxu0
    %v216 = vadd.f32 0.0, %v215
    %217 = vmatmul.f32.gmra.mxu0 %v127
    %v218 = vpop.f32.mrf.mxu0
    %v219 = vadd.f32 0.0, %v218
    %220 = vdwg.mxu0
    %v221 = vmax.f32 %v147, 0.0
    %v222 = vmax.f32 %v170, 0.0
    %v223 = vmax.f32 %v193, 0.0
    %v224 = vmax.f32 %v216, 0.0
    %v225 = vmax.f32 %v150, 0.0
    %v226 = vmax.f32 %v173, 0.0
    %v227 = vmax.f32 %v196, 0.0
    %v228 = vmax.f32 %v219, 0.0
    %v229 = vmin.f32 %v221, 6.0
    %v230 = vmin.f32 %v222, 6.0
    %v231 = vmin.f32 %v223, 6.0
    %v232 = vmin.f32 %v224, 6.0
    %v233 = vmin.f32 %v225, 6.0
    %v234 = vmin.f32 %v226, 6.0
    %v235 = vmin.f32 %v227, 6.0
    %v236 = vmin.f32 %v228, 6.0
    %237 = vrot.lane.b32.xlu0 %v229, 1
    %v238 = vpop.permute.xlu0 %237
    %239 = vrot.lane.b32.xlu0 %v230, 1
    %v240 = vpop.permute.xlu0 %239
    %241 = vrot.lane.b32.xlu0 %v231, 1
    %v242 = vpop.permute.xlu0 %241
    %243 = vrot.lane.b32.xlu0 %v232, 1
    %v244 = vpop.permute.xlu0 %243
    %v245 = vlaneseq
    %v246 = vand.u32 %v245, 127
    %vm247 = vcmp.lt.s32.totalorder %v246, 1
    %v248 = vsel %vm247, %v242, %v244
    %v249 = vsel %vm247, %v240, %v242
    %v250 = vsel %vm247, %v238, %v240
    %v251 = vsel %vm247, %v244, %v238
    %s252 = scalar_lea.vmem [#allocation5], 96
    %v253 = vld [vmem:[%s252] sm:$0xff]
    %v254 = vld [vmem:[%s252 + $0x8] sm:$0xff]
    %v255 = vld [vmem:[%s252 + $0x10] sm:$0xff]
    %v256 = vld [vmem:[%s252 + $0x18] sm:$0xff]
    %v257 = vmul.f32 %v251, %v253
    %v258 = vmul.f32 %v250, %v254
    %v259 = vmul.f32 %v249, %v255
    %v260 = vmul.f32 %v248, %v256
    %261 = vrot.lane.b32.xlu0 %v229, 127
    %v262 = vpop.permute.xlu0 %261
    %263 = vrot.lane.b32.xlu0 %v230, 127
    %v264 = vpop.permute.xlu0 %263
    %265 = vrot.lane.b32.xlu0 %v231, 127
    %v266 = vpop.permute.xlu0 %265
    %267 = vrot.lane.b32.xlu0 %v232, 127
    %v268 = vpop.permute.xlu0 %267
    %vm269 = vcmp.lt.s32.totalorder %v246, 127
    %v270 = vsel %vm269, %v266, %v268
    %v271 = vsel %vm269, %v264, %v266
    %v272 = vsel %vm269, %v262, %v264
    %v273 = vsel %vm269, %v268, %v262
    %s274 = scalar_lea.vmem [#allocation5], 160
    %v275 = vld [vmem:[%s274] sm:$0xff]
    %v276 = vld [vmem:[%s274 + $0x8] sm:$0xff]
    %v277 = vld [vmem:[%s274 + $0x10] sm:$0xff]
    %v278 = vld [vmem:[%s274 + $0x18] sm:$0xff]
    %v279 = vmul.f32 %v272, %v275
    %v280 = vmul.f32 %v271, %v276
    %v281 = vmul.f32 %v270, %v277
    %v282 = vmul.f32 %v273, %v278
    %283 = vrot.lane.b32.xlu0 %v233, 16
    %v284 = vpop.permute.xlu0 %283
    %285 = vrot.lane.b32.xlu0 %v234, 16
    %v286 = vpop.permute.xlu0 %285
    %287 = vrot.lane.b32.xlu0 %v235, 16
    %v288 = vpop.permute.xlu0 %287
    %289 = vrot.lane.b32.xlu0 %v236, 16
    %v290 = vpop.permute.xlu0 %289
    %vm291 = vcmp.lt.s32.totalorder %v246, 16
    %v292 = vsel %vm291, %v288, %v290
    %v293 = vsel %vm291, %v286, %v288
    %v294 = vsel %vm291, %v284, %v286
    %v295 = vsel %vm291, %v290, %v284
    %s296 = scalar_lea.vmem [#allocation5], 32
    %v297 = vld [vmem:[%s296] sm:$0xff]
    %v298 = vld [vmem:[%s296 + $0x8] sm:$0xff]
    %v299 = vld [vmem:[%s296 + $0x10] sm:$0xff]
    %v300 = vld [vmem:[%s296 + $0x18] sm:$0xff]
    %v301 = vmul.f32 %v295, %v297
    %v302 = vmul.f32 %v294, %v298
    %v303 = vmul.f32 %v293, %v299
    %v304 = vmul.f32 %v292, %v300
    %305 = vrot.lane.b32.xlu0 %v233, 112
    %v306 = vpop.permute.xlu0 %305
    %307 = vrot.lane.b32.xlu0 %v234, 112
    %v308 = vpop.permute.xlu0 %307
    %309 = vrot.lane.b32.xlu0 %v235, 112
    %v310 = vpop.permute.xlu0 %309
    %311 = vrot.lane.b32.xlu0 %v236, 112
    %v312 = vpop.permute.xlu0 %311
    %vm313 = vcmp.lt.s32.totalorder %v246, 112
    %v314 = vsel %vm313, %v310, %v312
    %v315 = vsel %vm313, %v308, %v310
    %v316 = vsel %vm313, %v306, %v308
    %v317 = vsel %vm313, %v312, %v306
    %s318 = scalar_lea.vmem [#allocation5], 224
    %v319 = vld [vmem:[%s318] sm:$0xff]
    %v320 = vld [vmem:[%s318 + $0x8] sm:$0xff]
    %v321 = vld [vmem:[%s318 + $0x10] sm:$0xff]
    %v322 = vld [vmem:[%s318 + $0x18] sm:$0xff]
    %v323 = vmul.f32 %v316, %v319
    %v324 = vmul.f32 %v315, %v320
    %v325 = vmul.f32 %v314, %v321
    %v326 = vmul.f32 %v317, %v322
    %327 = vrot.lane.b32.xlu0 %v112, 17
    %v328 = vpop.permute.xlu0 %327
    %329 = vrot.lane.b32.xlu0 %v113, 17
    %v330 = vpop.permute.xlu0 %329
    %331 = vrot.lane.b32.xlu0 %v114, 17
    %v332 = vpop.permute.xlu0 %331
    %333 = vrot.lane.b32.xlu0 %v115, 17
    %v334 = vpop.permute.xlu0 %333
    %vm335 = vcmp.lt.s32.totalorder %v246, 17
    %v336 = vsel %vm335, %v332, %v334
    %v337 = vsel %vm335, %v330, %v332
    %v338 = vsel %vm335, %v328, %v330
    %v339 = vsel %vm335, %v334, %v328
    %v340 = vld [vmem:[#allocation5] sm:$0xff]
    %v341 = vld [vmem:[#allocation5 + $0x8] sm:$0xff]
    %v342 = vld [vmem:[#allocation5 + $0x10] sm:$0xff]
    %v343 = vld [vmem:[#allocation5 + $0x18] sm:$0xff]
    %v344 = vmul.f32 %v339, %v340
    %v345 = vmul.f32 %v338, %v341
    %v346 = vmul.f32 %v337, %v342
    %v347 = vmul.f32 %v336, %v343
    %348 = vrot.lane.b32.xlu0 %v112, 16
    %v349 = vpop.permute.xlu0 %348
    %350 = vrot.lane.b32.xlu0 %v113, 16
    %v351 = vpop.permute.xlu0 %350
    %352 = vrot.lane.b32.xlu0 %v114, 16
    %v353 = vpop.permute.xlu0 %352
    %354 = vrot.lane.b32.xlu0 %v115, 16
    %v355 = vpop.permute.xlu0 %354
    %v356 = vsel %vm291, %v353, %v355
    %v357 = vsel %vm291, %v351, %v353
    %v358 = vsel %vm291, %v349, %v351
    %v359 = vsel %vm291, %v355, %v349
    %v360 = vmul.f32 %v359, %v297
    %v361 = vmul.f32 %v358, %v298
    %v362 = vmul.f32 %v357, %v299
    %v363 = vmul.f32 %v356, %v300
    %364 = vrot.lane.b32.xlu0 %v112, 15
    %v365 = vpop.permute.xlu0 %364
    %366 = vrot.lane.b32.xlu0 %v113, 15
    %v367 = vpop.permute.xlu0 %366
    %368 = vrot.lane.b32.xlu0 %v114, 15
    %v369 = vpop.permute.xlu0 %368
    %370 = vrot.lane.b32.xlu0 %v115, 15
    %v371 = vpop.permute.xlu0 %370
    %vm372 = vcmp.lt.s32.totalorder %v246, 15
    %v373 = vsel %vm372, %v369, %v371
    %v374 = vsel %vm372, %v367, %v369
    %v375 = vsel %vm372, %v365, %v367
    %v376 = vsel %vm372, %v371, %v365
    %s377 = scalar_lea.vmem [#allocation5], 64
    %v378 = vld [vmem:[%s377] sm:$0xff]
    %v379 = vld [vmem:[%s377 + $0x8] sm:$0xff]
    %v380 = vld [vmem:[%s377 + $0x10] sm:$0xff]
    %v381 = vld [vmem:[%s377 + $0x18] sm:$0xff]
    %v382 = vmul.f32 %v376, %v378
    %v383 = vmul.f32 %v375, %v379
    %v384 = vmul.f32 %v374, %v380
    %v385 = vmul.f32 %v373, %v381
    %386 = vrot.lane.b32.xlu0 %v112, 1
    %v387 = vpop.permute.xlu0 %386
    %388 = vrot.lane.b32.xlu0 %v113, 1
    %v389 = vpop.permute.xlu0 %388
    %390 = vrot.lane.b32.xlu0 %v114, 1
    %v391 = vpop.permute.xlu0 %390
    %392 = vrot.lane.b32.xlu0 %v115, 1
    %v393 = vpop.permute.xlu0 %392
    %v394 = vsel %vm247, %v391, %v393
    %v395 = vsel %vm247, %v389, %v391
    %v396 = vsel %vm247, %v387, %v389
    %v397 = vsel %vm247, %v393, %v387
    %v398 = vmul.f32 %v397, %v253
    %v399 = vmul.f32 %v396, %v254
    %v400 = vmul.f32 %v395, %v255
    %v401 = vmul.f32 %v394, %v256
    %402 = vrot.lane.b32.xlu0 %v112, 127
    %v403 = vpop.permute.xlu0 %402
    %404 = vrot.lane.b32.xlu0 %v113, 127
    %v405 = vpop.permute.xlu0 %404
    %406 = vrot.lane.b32.xlu0 %v114, 127
    %v407 = vpop.permute.xlu0 %406
    %408 = vrot.lane.b32.xlu0 %v115, 127
    %v409 = vpop.permute.xlu0 %408
    %v410 = vsel %vm269, %v407, %v409
    %v411 = vsel %vm269, %v405, %v407
    %v412 = vsel %vm269, %v403, %v405
    %v413 = vsel %vm269, %v409, %v403
    %v414 = vmul.f32 %v412, %v275
    %v415 = vmul.f32 %v411, %v276
    %v416 = vmul.f32 %v410, %v277
    %v417 = vmul.f32 %v413, %v278
    %418 = vrot.lane.b32.xlu0 %v112, 113
    %v419 = vpop.permute.xlu0 %418
    %420 = vrot.lane.b32.xlu0 %v113, 113
    %v421 = vpop.permute.xlu0 %420
    %422 = vrot.lane.b32.xlu0 %v114, 113
    %v423 = vpop.permute.xlu0 %422
    %424 = vrot.lane.b32.xlu0 %v115, 113
    %v425 = vpop.permute.xlu0 %424
    %vm426 = vcmp.lt.s32.totalorder %v246, 113
    %v427 = vsel %vm426, %v423, %v425
    %v428 = vsel %vm426, %v421, %v423
    %v429 = vsel %vm426, %v419, %v421
    %v430 = vsel %vm426, %v425, %v419
    %s431 = scalar_lea.vmem [#allocation5], 192
    %v432 = vld [vmem:[%s431] sm:$0xff]
    %v433 = vld [vmem:[%s431 + $0x8] sm:$0xff]
    %v434 = vld [vmem:[%s431 + $0x10] sm:$0xff]
    %v435 = vld [vmem:[%s431 + $0x18] sm:$0xff]
    %v436 = vmul.f32 %v429, %v432
    %v437 = vmul.f32 %v428, %v433
    %v438 = vmul.f32 %v427, %v434
    %v439 = vmul.f32 %v430, %v435
    %440 = vrot.lane.b32.xlu0 %v112, 112
    %v441 = vpop.permute.xlu0 %440
    %442 = vrot.lane.b32.xlu0 %v113, 112
    %v443 = vpop.permute.xlu0 %442
    %444 = vrot.lane.b32.xlu0 %v114, 112
    %v445 = vpop.permute.xlu0 %444
    %446 = vrot.lane.b32.xlu0 %v115, 112
    %v447 = vpop.permute.xlu0 %446
    %v448 = vsel %vm313, %v445, %v447
    %v449 = vsel %vm313, %v443, %v445
    %v450 = vsel %vm313, %v441, %v443
    %v451 = vsel %vm313, %v447, %v441
    %v452 = vmul.f32 %v450, %v319
    %v453 = vmul.f32 %v449, %v320
    %v454 = vmul.f32 %v448, %v321
    %v455 = vmul.f32 %v451, %v322
    %456 = vrot.lane.b32.xlu0 %v112, 111
    %v457 = vpop.permute.xlu0 %456
    %458 = vrot.lane.b32.xlu0 %v113, 111
    %v459 = vpop.permute.xlu0 %458
    %460 = vrot.lane.b32.xlu0 %v114, 111
    %v461 = vpop.permute.xlu0 %460
    %462 = vrot.lane.b32.xlu0 %v115, 111
    %v463 = vpop.permute.xlu0 %462
    %vm464 = vcmp.lt.s32.totalorder %v246, 111
    %v465 = vsel %vm464, %v461, %v463
    %v466 = vsel %vm464, %v459, %v461
    %v467 = vsel %vm464, %v457, %v459
    %v468 = vsel %vm464, %v463, %v457
    %s469 = scalar_lea.vmem [#allocation5], 256
    %v470 = vld [vmem:[%s469] sm:$0xff]
    %v471 = vld [vmem:[%s469 + $0x8] sm:$0xff]
    %v472 = vld [vmem:[%s469 + $0x10] sm:$0xff]
    %v473 = vld [vmem:[%s469 + $0x18] sm:$0xff]
    %v474 = vmul.f32 %v467, %v470
    %v475 = vmul.f32 %v466, %v471
    %v476 = vmul.f32 %v465, %v472
    %v477 = vmul.f32 %v468, %v473
    %v478 = vld [vmem:[#allocation10] sm:$0xff]
    %v479 = vld [vmem:[#allocation10 + $0x8] sm:$0xff]
    %v480 = vld [vmem:[#allocation10 + $0x10] sm:$0xff]
    %481 = vmatpush.msra.mxu0 %v116
    %482 = vmatpush.msra.mxu0 %v474
    %483 = vmatpush.msra.mxu0 %v452
    %484 = vmatpush.msra.mxu0 %v436
    %485 = vmatpush.msra.mxu0 %v414
    %486 = vmatpush.msra.mxu0 %v112
    %487 = vmatpush.msra.mxu0 %v398
    %488 = vmatpush.msra.mxu0 %v382
    %489 = vmatpush.msra.mxu0 %v360
    %490 = vmatpush.msra.mxu0 %v344
    %491 = vmatpush.msra.mxu0 %v323
    %492 = vmatpush.msra.mxu0 %v233
    %493 = vmatpush.msra.mxu0 %v301
    %494 = vmatpush.msra.mxu0 %v279
    %495 = vmatpush.msra.mxu0 %v229
    %496 = vmatpush.msra.mxu0 %v257
    %497 = vmatmul.f32.gmra.mxu0 %v478
    %v498 = vpop.f32.mrf.mxu0
    %v499 = vadd.f32 0.0, %v498
    %500 = vmatmul.f32.gmra.mxu0 %v479
    %v501 = vpop.f32.mrf.mxu0
    %v502 = vadd.f32 0.0, %v501
    %503 = vmatmul.f32.gmra.mxu0 %v480
    %v504 = vpop.f32.mrf.mxu0
    %v505 = vadd.f32 0.0, %v504
    %506 = vdwg.mxu0
    %507 = vmatpush.msra.mxu0 %v117
    %508 = vmatpush.msra.mxu0 %v475
    %509 = vmatpush.msra.mxu0 %v453
    %510 = vmatpush.msra.mxu0 %v437
    %511 = vmatpush.msra.mxu0 %v415
    %512 = vmatpush.msra.mxu0 %v113
    %513 = vmatpush.msra.mxu0 %v399
    %514 = vmatpush.msra.mxu0 %v383
    %515 = vmatpush.msra.mxu0 %v361
    %516 = vmatpush.msra.mxu0 %v345
    %517 = vmatpush.msra.mxu0 %v324
    %518 = vmatpush.msra.mxu0 %v234
    %519 = vmatpush.msra.mxu0 %v302
    %520 = vmatpush.msra.mxu0 %v280
    %521 = vmatpush.msra.mxu0 %v230
    %522 = vmatpush.msra.mxu0 %v258
    %523 = vmatmul.f32.gmra.mxu0 %v478
    %v524 = vpop.f32.mrf.mxu0
    %v525 = vadd.f32 0.0, %v524
    %526 = vmatmul.f32.gmra.mxu0 %v479
    %v527 = vpop.f32.mrf.mxu0
    %v528 = vadd.f32 0.0, %v527
    %529 = vmatmul.f32.gmra.mxu0 %v480
    %v530 = vpop.f32.mrf.mxu0
    %v531 = vadd.f32 0.0, %v530
    %532 = vdwg.mxu0
    %533 = vmatpush.msra.mxu0 %v118
    %534 = vmatpush.msra.mxu0 %v476
    %535 = vmatpush.msra.mxu0 %v454
    %536 = vmatpush.msra.mxu0 %v438
    %537 = vmatpush.msra.mxu0 %v416
    %538 = vmatpush.msra.mxu0 %v114
    %539 = vmatpush.msra.mxu0 %v400
    %540 = vmatpush.msra.mxu0 %v384
    %541 = vmatpush.msra.mxu0 %v362
    %542 = vmatpush.msra.mxu0 %v346
    %543 = vmatpush.msra.mxu0 %v325
    %544 = vmatpush.msra.mxu0 %v235
    %545 = vmatpush.msra.mxu0 %v303
    %546 = vmatpush.msra.mxu0 %v281
    %547 = vmatpush.msra.mxu0 %v231
    %548 = vmatpush.msra.mxu0 %v259
    %549 = vmatmul.f32.gmra.mxu0 %v478
    %v550 = vpop.f32.mrf.mxu0
    %v551 = vadd.f32 0.0, %v550
    %552 = vmatmul.f32.gmra.mxu0 %v479
    %v553 = vpop.f32.mrf.mxu0
    %v554 = vadd.f32 0.0, %v553
    %555 = vmatmul.f32.gmra.mxu0 %v480
    %v556 = vpop.f32.mrf.mxu0
    %v557 = vadd.f32 0.0, %v556
    %558 = vdwg.mxu0
    %559 = vmatpush.msra.mxu0 %v119
    %560 = vmatpush.msra.mxu0 %v477
    %561 = vmatpush.msra.mxu0 %v455
    %562 = vmatpush.msra.mxu0 %v439
    %563 = vmatpush.msra.mxu0 %v417
    %564 = vmatpush.msra.mxu0 %v115
    %565 = vmatpush.msra.mxu0 %v401
    %566 = vmatpush.msra.mxu0 %v385
    %567 = vmatpush.msra.mxu0 %v363
    %568 = vmatpush.msra.mxu0 %v347
    %569 = vmatpush.msra.mxu0 %v326
    %570 = vmatpush.msra.mxu0 %v236
    %571 = vmatpush.msra.mxu0 %v304
    %572 = vmatpush.msra.mxu0 %v282
    %573 = vmatpush.msra.mxu0 %v232
    %574 = vmatpush.msra.mxu0 %v260
    %575 = vmatmul.f32.gmra.mxu0 %v478
    %v576 = vpop.f32.mrf.mxu0
    %v577 = vadd.f32 0.0, %v576
    %578 = vmatmul.f32.gmra.mxu0 %v479
    %v579 = vpop.f32.mrf.mxu0
    %v580 = vadd.f32 0.0, %v579
    %581 = vmatmul.f32.gmra.mxu0 %v480
    %v582 = vpop.f32.mrf.mxu0
    %v583 = vadd.f32 0.0, %v582
    %584 = vdwg.mxu0
    %v585 = vmax.f32 %v499, 0.0
    %v586 = vmax.f32 %v525, 0.0
    %v587 = vmax.f32 %v551, 0.0
    %v588 = vmax.f32 %v577, 0.0
    %v589 = vmax.f32 %v502, 0.0
    %v590 = vmax.f32 %v528, 0.0
    %v591 = vmax.f32 %v554, 0.0
    %v592 = vmax.f32 %v580, 0.0
    %v593 = vmax.f32 %v505, 0.0
    %v594 = vmax.f32 %v531, 0.0
    %v595 = vmax.f32 %v557, 0.0
    %v596 = vmax.f32 %v583, 0.0
    %v597 = vmin.f32 %v585, 6.0
    %v598 = vmin.f32 %v586, 6.0
    %v599 = vmin.f32 %v587, 6.0
    %v600 = vmin.f32 %v588, 6.0
    %v601 = vmin.f32 %v589, 6.0
    %v602 = vmin.f32 %v590, 6.0
    %v603 = vmin.f32 %v591, 6.0
    %v604 = vmin.f32 %v592, 6.0
    %v605 = vmin.f32 %v593, 6.0
    %v606 = vmin.f32 %v594, 6.0
    %v607 = vmin.f32 %v595, 6.0
    %v608 = vmin.f32 %v596, 6.0
    %v609 = vadd.f32 %v597, %v601
    %v610 = vadd.f32 %v598, %v602
    %v611 = vadd.f32 %v599, %v603
    %v612 = vadd.f32 %v600, %v604
    %v613 = vadd.f32 %v609, %v605
    %v614 = vadd.f32 %v610, %v606
    %v615 = vadd.f32 %v611, %v607
    %v616 = vadd.f32 %v612, %v608
    %617 = vrot.lane.b32.xlu0 %v613, 17
    %v618 = vpop.permute.xlu0 %617
    %619 = vrot.lane.b32.xlu0 %v614, 17
    %v620 = vpop.permute.xlu0 %619
    %621 = vrot.lane.b32.xlu0 %v615, 17
    %v622 = vpop.permute.xlu0 %621
    %623 = vrot.lane.b32.xlu0 %v616, 17
    %v624 = vpop.permute.xlu0 %623
    %v625 = vsel %vm335, %v622, %v624
    %v626 = vsel %vm335, %v620, %v622
    %v627 = vsel %vm335, %v618, %v620
    %v628 = vsel %vm335, %v624, %v618
    %v629 = vmul.f32 %v628, %v340
    %v630 = vmul.f32 %v627, %v341
    %v631 = vmul.f32 %v626, %v342
    %v632 = vmul.f32 %v625, %v343
    %633 = vrot.lane.b32.xlu0 %v613, 16
    %v634 = vpop.permute.xlu0 %633
    %635 = vrot.lane.b32.xlu0 %v614, 16
    %v636 = vpop.permute.xlu0 %635
    %637 = vrot.lane.b32.xlu0 %v615, 16
    %v638 = vpop.permute.xlu0 %637
    %639 = vrot.lane.b32.xlu0 %v616, 16
    %v640 = vpop.permute.xlu0 %639
    %v641 = vsel %vm291, %v638, %v640
    %v642 = vsel %vm291, %v636, %v638
    %v643 = vsel %vm291, %v634, %v636
    %v644 = vsel %vm291, %v640, %v634
    %v645 = vmul.f32 %v644, %v297
    %v646 = vmul.f32 %v643, %v298
    %v647 = vmul.f32 %v642, %v299
    %v648 = vmul.f32 %v641, %v300
    %649 = vrot.lane.b32.xlu0 %v613, 15
    %v650 = vpop.permute.xlu0 %649
    %651 = vrot.lane.b32.xlu0 %v614, 15
    %v652 = vpop.permute.xlu0 %651
    %653 = vrot.lane.b32.xlu0 %v615, 15
    %v654 = vpop.permute.xlu0 %653
    %655 = vrot.lane.b32.xlu0 %v616, 15
    %v656 = vpop.permute.xlu0 %655
    %v657 = vsel %vm372, %v654, %v656
    %v658 = vsel %vm372, %v652, %v654
    %v659 = vsel %vm372, %v650, %v652
    %v660 = vsel %vm372, %v656, %v650
    %v661 = vmul.f32 %v660, %v378
    %v662 = vmul.f32 %v659, %v379
    %v663 = vmul.f32 %v658, %v380
    %v664 = vmul.f32 %v657, %v381
    %665 = vrot.lane.b32.xlu0 %v613, 1
    %v666 = vpop.permute.xlu0 %665
    %667 = vrot.lane.b32.xlu0 %v614, 1
    %v668 = vpop.permute.xlu0 %667
    %669 = vrot.lane.b32.xlu0 %v615, 1
    %v670 = vpop.permute.xlu0 %669
    %671 = vrot.lane.b32.xlu0 %v616, 1
    %v672 = vpop.permute.xlu0 %671
    %v673 = vsel %vm247, %v670, %v672
    %v674 = vsel %vm247, %v668, %v670
    %v675 = vsel %vm247, %v666, %v668
    %v676 = vsel %vm247, %v672, %v666
    %v677 = vmul.f32 %v676, %v253
    %v678 = vmul.f32 %v675, %v254
    %v679 = vmul.f32 %v674, %v255
    %v680 = vmul.f32 %v673, %v256
    %681 = vrot.lane.b32.xlu0 %v613, 127
    %v682 = vpop.permute.xlu0 %681
    %683 = vrot.lane.b32.xlu0 %v614, 127
    %v684 = vpop.permute.xlu0 %683
    %685 = vrot.lane.b32.xlu0 %v615, 127
    %v686 = vpop.permute.xlu0 %685
    %687 = vrot.lane.b32.xlu0 %v616, 127
    %v688 = vpop.permute.xlu0 %687
    %v689 = vsel %vm269, %v686, %v688
    %v690 = vsel %vm269, %v684, %v686
    %v691 = vsel %vm269, %v682, %v684
    %v692 = vsel %vm269, %v688, %v682
    %v693 = vmul.f32 %v691, %v275
    %v694 = vmul.f32 %v690, %v276
    %v695 = vmul.f32 %v689, %v277
    %v696 = vmul.f32 %v692, %v278
    %697 = vrot.lane.b32.xlu0 %v613, 113
    %v698 = vpop.permute.xlu0 %697
    %699 = vrot.lane.b32.xlu0 %v614, 113
    %v700 = vpop.permute.xlu0 %699
    %701 = vrot.lane.b32.xlu0 %v615, 113
    %v702 = vpop.permute.xlu0 %701
    %703 = vrot.lane.b32.xlu0 %v616, 113
    %v704 = vpop.permute.xlu0 %703
    %v705 = vsel %vm426, %v702, %v704
    %v706 = vsel %vm426, %v700, %v702
    %v707 = vsel %vm426, %v698, %v700
    %v708 = vsel %vm426, %v704, %v698
    %v709 = vmul.f32 %v707, %v432
    %v710 = vmul.f32 %v706, %v433
    %v711 = vmul.f32 %v705, %v434
    %v712 = vmul.f32 %v708, %v435
    %713 = vrot.lane.b32.xlu0 %v613, 112
    %v714 = vpop.permute.xlu0 %713
    %715 = vrot.lane.b32.xlu0 %v614, 112
    %v716 = vpop.permute.xlu0 %715
    %717 = vrot.lane.b32.xlu0 %v615, 112
    %v718 = vpop.permute.xlu0 %717
    %719 = vrot.lane.b32.xlu0 %v616, 112
    %v720 = vpop.permute.xlu0 %719
    %v721 = vsel %vm313, %v718, %v720
    %v722 = vsel %vm313, %v716, %v718
    %v723 = vsel %vm313, %v714, %v716
    %v724 = vsel %vm313, %v720, %v714
    %v725 = vmul.f32 %v723, %v319
    %v726 = vmul.f32 %v722, %v320
    %v727 = vmul.f32 %v721, %v321
    %v728 = vmul.f32 %v724, %v322
    %729 = vrot.lane.b32.xlu0 %v613, 111
    %v730 = vpop.permute.xlu0 %729
    %731 = vrot.lane.b32.xlu0 %v614, 111
    %v732 = vpop.permute.xlu0 %731
    %733 = vrot.lane.b32.xlu0 %v615, 111
    %v734 = vpop.permute.xlu0 %733
    %735 = vrot.lane.b32.xlu0 %v616, 111
    %v736 = vpop.permute.xlu0 %735
    %v737 = vsel %vm464, %v734, %v736
    %v738 = vsel %vm464, %v732, %v734
    %v739 = vsel %vm464, %v730, %v732
    %v740 = vsel %vm464, %v736, %v730
    %v741 = vmul.f32 %v739, %v470
    %v742 = vmul.f32 %v738, %v471
    %v743 = vmul.f32 %v737, %v472
    %v744 = vmul.f32 %v740, %v473
    %v745 = vld [vmem:[#allocation11] sm:$0xff]
    %vm746 = vcmask 654336
    %v748 = vsel %vm746, %v745, 0
    %750 = vmatpush.msra.mxu0 0.0
    %751 = vmatpush.msra.mxu0 0.0
    %752 = vmatpush.msra.mxu0 0.0
    %753 = vmatpush.msra.mxu0 0.0
    %754 = vmatpush.msra.mxu0 0.0
    %755 = vmatpush.msra.mxu0 0.0
    %756 = vmatpush.msra.mxu0 %v116
    %757 = vmatpush.msra.mxu0 %v741
    %758 = vmatpush.msra.mxu0 %v725
    %759 = vmatpush.msra.mxu0 %v709
    %760 = vmatpush.msra.mxu0 %v693
    %761 = vmatpush.msra.mxu0 %v613
    %762 = vmatpush.msra.mxu0 %v677
    %763 = vmatpush.msra.mxu0 %v661
    %764 = vmatpush.msra.mxu0 %v645
    %765 = vmatpush.msra.mxu0 %v629
    %766 = vmatmul.f32.gmra.mxu0 %v748
    %v767 = vpop.f32.mrf.mxu0
    %v768 = vadd.f32 0.0, %v767
    %769 = vdwg.mxu0
    %770 = vmatpush.msra.mxu0 0.0
    %771 = vmatpush.msra.mxu0 0.0
    %772 = vmatpush.msra.mxu0 0.0
    %773 = vmatpush.msra.mxu0 0.0
    %774 = vmatpush.msra.mxu0 0.0
    %775 = vmatpush.msra.mxu0 0.0
    %776 = vmatpush.msra.mxu0 %v117
    %777 = vmatpush.msra.mxu0 %v742
    %778 = vmatpush.msra.mxu0 %v726
    %779 = vmatpush.msra.mxu0 %v710
    %780 = vmatpush.msra.mxu0 %v694
    %781 = vmatpush.msra.mxu0 %v614
    %782 = vmatpush.msra.mxu0 %v678
    %783 = vmatpush.msra.mxu0 %v662
    %784 = vmatpush.msra.mxu0 %v646
    %785 = vmatpush.msra.mxu0 %v630
    %786 = vmatmul.f32.gmra.mxu0 %v748
    %v787 = vpop.f32.mrf.mxu0
    %v788 = vadd.f32 0.0, %v787
    %789 = vdwg.mxu0
    %790 = vmatpush.msra.mxu0 0.0
    %791 = vmatpush.msra.mxu0 0.0
    %792 = vmatpush.msra.mxu0 0.0
    %793 = vmatpush.msra.mxu0 0.0
    %794 = vmatpush.msra.mxu0 0.0
    %795 = vmatpush.msra.mxu0 0.0
    %796 = vmatpush.msra.mxu0 %v118
    %797 = vmatpush.msra.mxu0 %v743
    %798 = vmatpush.msra.mxu0 %v727
    %799 = vmatpush.msra.mxu0 %v711
    %800 = vmatpush.msra.mxu0 %v695
    %801 = vmatpush.msra.mxu0 %v615
    %802 = vmatpush.msra.mxu0 %v679
    %803 = vmatpush.msra.mxu0 %v663
    %804 = vmatpush.msra.mxu0 %v647
    %805 = vmatpush.msra.mxu0 %v631
    %806 = vmatmul.f32.gmra.mxu0 %v748
    %v807 = vpop.f32.mrf.mxu0
    %v808 = vadd.f32 0.0, %v807
    %809 = vdwg.mxu0
    %810 = vmatpush.msra.mxu0 0.0
    %811 = vmatpush.msra.mxu0 0.0
    %812 = vmatpush.msra.mxu0 0.0
    %813 = vmatpush.msra.mxu0 0.0
    %814 = vmatpush.msra.mxu0 0.0
    %815 = vmatpush.msra.mxu0 0.0
    %816 = vmatpush.msra.mxu0 %v119
    %817 = vmatpush.msra.mxu0 %v744
    %818 = vmatpush.msra.mxu0 %v728
    %819 = vmatpush.msra.mxu0 %v712
    %820 = vmatpush.msra.mxu0 %v696
    %821 = vmatpush.msra.mxu0 %v616
    %822 = vmatpush.msra.mxu0 %v680
    %823 = vmatpush.msra.mxu0 %v664
    %824 = vmatpush.msra.mxu0 %v648
    %825 = vmatpush.msra.mxu0 %v632
    %826 = vmatmul.f32.gmra.mxu0 %v748
    %v827 = vpop.f32.mrf.mxu0
    %v828 = vadd.f32 0.0, %v827
    %829 = vdwg.mxu0
    %v830 = vmax.f32 %v768, 0.0
    %v831 = vmax.f32 %v788, 0.0
    %v832 = vmax.f32 %v808, 0.0
    %v833 = vmax.f32 %v828, 0.0
    %v834 = vmin.f32 %v830, 6.0
    %v835 = vmin.f32 %v831, 6.0
    %v836 = vmin.f32 %v832, 6.0
    %v837 = vmin.f32 %v833, 6.0
    %838 = vst [vmem:[#allocation13] sm:$0xff] %v834
    %839 = vst [vmem:[#allocation13 + $0x8] sm:$0xff] %v835
    %840 = vst [vmem:[#allocation13 + $0x10] sm:$0xff] %v836
    %841 = vst [vmem:[#allocation13 + $0x18] sm:$0xff] %v837
    // Predicated region
    $region50: #{tpu_custom_call.1} parent=1 // pred_check
      _
    $region51: #{tpu_custom_call.1} parent=1 // pred_check_branch
      %843 = sbr.rel (0) target = $region53
    $region52: #{tpu_custom_call.1} parent=1 // pred_region
      %845 = vsyncadd [#allocation4], 0
      %s847 = sshll.u32 [#allocation13], 4
      %s848 = int_to_ptr.vmem [resolvable:$true] %s847
      %s849 = sshll.u32 %s6, 4
      %s850 = int_to_ptr.hbm [resolvable:$true] %s849
      %852 = dma.vmem_to_hbm [thread:$0]  %s848, 512, %s850, [#allocation4]
    $region53: #{tpu_custom_call.1} parent=1 // pred_fallthru
      _
    // Predicated region
    $region54: #{tpu_custom_call.1} parent=1 // pred_check
      _
    $region55: #{tpu_custom_call.1} parent=1 // pred_check_branch
      %854 = sbr.rel (0) target = $region57
    $region56: #{tpu_custom_call.1} parent=1 // pred_region
      %856 = dma.done [#allocation4], 512
    $region57: #{tpu_custom_call.1} parent=1 // pred_fallthru
      _
    %857 = vsyncpa [#allocation3], 1
    %858 = vsyncpa [#allocation6], 1
    %859 = vsyncpa [#allocation9], 1
    %860 = vsyncpa [#allocation12], 1
    %861 = vsyncpa [#allocation4], 1

</llo_original>
